<compile_context>
chip_gen: v6e
topology: v6e:2x2x1
jax: 0.10.0
libtpu: 0.0.40
codegen_flags: <defaults>
</compile_context>

<pallas_src>
import math
from functools import partial

import jax
import jax.numpy as jnp
from jax.experimental import pallas as pl
from jax.experimental.pallas import tpu as pltpu


def _attention_kernel(x_ref, wqkv_ref, bqkv_ref, wo_ref, bo_ref, out_ref,
                      acc_ref, *, bt, seq, num_heads, head_dim):
    # x_ref: (Bt, S, H) bf16 block; acc_ref: (Bt*S, H) f32 scratch.
    H = num_heads * head_dim
    M = bt * seq

    x = x_ref[...].reshape(M, H)                                  # (Bt*S, H) bf16

    # Fused QKV projection: one wide bf16 MXU matmul, f32 accumulation.
    # wqkv is pre-transposed (H, 3H); 1/sqrt(head_dim) already folded into the
    # query columns and query bias.
    qkv = jnp.dot(x, wqkv_ref[...],
                  preferred_element_type=jnp.float32) + bqkv_ref[...]  # (M, 3H) f32
    qkv_bf = qkv.astype(jnp.bfloat16).reshape(bt, seq, 3 * H)

    # Output-projection accumulator, initialized with the output bias so the
    # epilogue add is folded into the init.
    acc_ref[...] = jnp.broadcast_to(bo_ref[...], (M, H)).astype(jnp.float32)

    for h in range(num_heads):                                    # static unroll
        lo = h * head_dim
        q_h = qkv_bf[:, :, lo:lo + head_dim]                      # (Bt, S, d)
        k_h = qkv_bf[:, :, H + lo:H + lo + head_dim]              # (Bt, S, d)
        v_h = qkv_bf[:, :, 2 * H + lo:2 * H + lo + head_dim]      # (Bt, S, d)

        # scores = q_h @ k_h^T per sample (contraction on d, no XLU transpose).
        s = jnp.einsum('bqd,bkd->bqk', q_h, k_h,
                       preferred_element_type=jnp.float32)        # (Bt, S, S)

        # Numerically-stable softmax with deferred normalization.
        m = jnp.max(s, axis=-1, keepdims=True)
        e = jnp.exp(s - m)                                        # (Bt, S, S)
        denom = jnp.sum(e, axis=-1, keepdims=True)                # (Bt, S, 1)

        # Unnormalized context, then normalize the small (Bt, S, d) tensor with
        # an EUP reciprocal instead of dividing the (S, S) probs on the VALU.
        ctx_u = jnp.einsum('bqk,bkd->bqd', e.astype(jnp.bfloat16), v_h,
                           preferred_element_type=jnp.float32)    # (Bt, S, d)
        ctx_h = (ctx_u * pl.reciprocal(denom, approx=True)).astype(jnp.bfloat16)

        # Per-head slice of the output projection (sublane slice of Wo, offset
        # is a multiple of head_dim), accumulated in f32 into the scratch.
        acc_ref[...] += jnp.dot(ctx_h.reshape(M, head_dim),
                                wo_ref[lo:lo + head_dim, :],
                                preferred_element_type=jnp.float32)
        # TODO(synk): attention_probs dropout / head_mask omitted (eval mode, mask=None)

    out_ref[...] = acc_ref[...].reshape(bt, seq, H).astype(out_ref.dtype)


def prepare_vit_mae_attention_params(params, num_heads):
    """One-time weight preparation (call at model init, NOT per forward).

    params: dict of PyTorch-layout (out, in) weights / (out,) biases.
    Returns dict of kernel-ready arrays:
      w_qkv (H, 3H) bf16, b_qkv (1, 3H) f32, w_o (H, H) bf16, b_o (1, H) f32.
    """
    H = params['wq'].shape[0]
    assert H % num_heads == 0
    head_dim = H // num_heads
    scale = 1.0 / math.sqrt(head_dim)

    wq_t = params['wq'].T * scale          # fold softmax scale into Wq
    wk_t = params['wk'].T
    wv_t = params['wv'].T
    w_qkv = jnp.concatenate([wq_t, wk_t, wv_t], axis=1).astype(jnp.bfloat16)  # (H, 3H)
    b_qkv = jnp.concatenate(
        [params['bq'] * scale, params['bk'], params['bv']]
    ).reshape(1, 3 * H).astype(jnp.float32)
    w_o = params['wo'].T.astype(jnp.bfloat16)                                 # (H, H)
    b_o = params['bo'].reshape(1, H).astype(jnp.float32)
    return {'w_qkv': w_qkv, 'b_qkv': b_qkv, 'w_o': w_o, 'b_o': b_o}


def _pick_bt(B):
    """Largest batch tile in {4,2,1} dividing B while keeping >=2 grid steps."""
    for bt in (4, 2, 1):
        if B % bt == 0 and (B // bt >= 2 or B < 2):
            return bt
    return 1


def _vmem_estimate_bytes(bt, S, H, out_itemsize):
    x_blk = bt * S * H * 2                 # bf16 input block
    out_blk = bt * S * H * out_itemsize    # output block
    w_qkv = H * 3 * H * 2                  # bf16
    w_o = H * H * 2                        # bf16
    biases = (3 * H + H) * 4
    acc = bt * S * H * 4                   # f32 scratch
    qkv_tmp = bt * S * 3 * H * (4 + 2)     # f32 qkv + bf16 copy
    # pipelined blocks + weights are double-buffered by default
    return 2 * (x_blk + out_blk + w_qkv + w_o + biases) + acc + qkv_tmp


def vit_mae_attention(hidden_states, prepared, num_heads):
    """hidden_states: (B, S, H). prepared: output of prepare_vit_mae_attention_params."""
    B, S, H = hidden_states.shape
    assert H % num_heads == 0
    head_dim = H // num_heads
    out_dtype = hidden_states.dtype

    bt = _pick_bt(B)
    x_bf = hidden_states.astype(jnp.bfloat16)

    kernel = partial(_attention_kernel, bt=bt, seq=S,
                     num_heads=num_heads, head_dim=head_dim)

    # VMEM budgeting for large (ViT-L/H) configs; the small-shape path passes
    # no explicit limit (v5e default 16 MiB / v6e-v7x 32 MiB suffice there).
    vmem_est = _vmem_estimate_bytes(bt, S, H, jnp.dtype(out_dtype).itemsize)
    cp_kwargs = dict(dimension_semantics=("parallel",))
    if vmem_est > 32 * 1024 * 1024:
        cp_kwargs['vmem_limit_bytes'] = min(int(vmem_est * 1.25), 64 * 1024 * 1024)
    compiler_params = pltpu.CompilerParams(**cp_kwargs)

    return pl.pallas_call(
        kernel,
        out_shape=jax.ShapeDtypeStruct((B, S, H), out_dtype),
        grid_spec=pltpu.PrefetchScalarGridSpec(
            num_scalar_prefetch=0,
            grid=(B // bt,),
            in_specs=[
                pl.BlockSpec((bt, S, H), lambda i: (i, 0, 0)),    # hidden_states
                pl.BlockSpec((H, 3 * H), lambda i: (0, 0)),       # fused QKV weight
                pl.BlockSpec((1, 3 * H), lambda i: (0, 0)),       # fused QKV bias
                pl.BlockSpec((H, H), lambda i: (0, 0)),           # output weight
                pl.BlockSpec((1, H), lambda i: (0, 0)),           # output bias
            ],
            out_specs=pl.BlockSpec((bt, S, H), lambda i: (i, 0, 0)),
            scratch_shapes=[pltpu.VMEM((bt * S, H), jnp.float32)],  # proj accumulator
        ),
        compiler_params=compiler_params,
    )(x_bf, prepared['w_qkv'], prepared['b_qkv'], prepared['w_o'], prepared['b_o'])


def _reference(hidden_states, params, num_heads):
    """Pure-JAX f32 reference matching the PyTorch module."""
    B, S, H = hidden_states.shape
    d = H // num_heads
    x = hidden_states
    q = x @ params['wq'].T + params['bq']
    k = x @ params['wk'].T + params['bk']
    v = x @ params['wv'].T + params['bv']

    def split(t):
        return t.reshape(B, S, num_heads, d).transpose(0, 2, 1, 3)

    q, k, v = split(q), split(k), split(v)
    scores = jnp.einsum('bhqd,bhkd->bhqk', q, k) / math.sqrt(d)
    probs = jax.nn.softmax(scores, axis=-1)
    ctx = jnp.einsum('bhqk,bhkd->bhqd', probs, v)
    ctx = ctx.transpose(0, 2, 1, 3).reshape(B, S, H)
    return ctx @ params['wo'].T + params['bo']


if __name__ == "__main__":
    # Small config consistent with the module: hidden_size=32, num_heads=4, seq=8.
    B, S, H = 2, 8, 32
    num_heads = 4

    key = jax.random.PRNGKey(0)
    keys = jax.random.split(key, 9)
    wscale = 0.2
    params = {
        'wq': wscale * jax.random.normal(keys[0], (H, H), jnp.float32),
        'bq': wscale * jax.random.normal(keys[1], (H,), jnp.float32),
        'wk': wscale * jax.random.normal(keys[2], (H, H), jnp.float32),
        'bk': wscale * jax.random.normal(keys[3], (H,), jnp.float32),
        'wv': wscale * jax.random.normal(keys[4], (H, H), jnp.float32),
        'bv': wscale * jax.random.normal(keys[5], (H,), jnp.float32),
        'wo': wscale * jax.random.normal(keys[6], (H, H), jnp.float32),
        'bo': wscale * jax.random.normal(keys[7], (H,), jnp.float32),
    }
    hidden_states = jax.random.normal(keys[8], (B, S, H), jnp.float32)

    # One-time weight prep (transpose / scale-fold / fuse / bf16 cast).
    prepared = jax.tree_util.tree_map(jax.block_until_ready,
                                      prepare_vit_mae_attention_params(params, num_heads))

    out = vit_mae_attention(hidden_states, prepared, num_heads)
    out = jax.block_until_ready(out)

    ref = _reference(hidden_states, params, num_heads)
    assert out.shape == (B, S, H)
    # Tolerance accounts for bf16 MXU inputs (f32 accumulation) + approx
    # reciprocal in the kernel vs. the all-f32 reference.
    assert jnp.allclose(out, ref, atol=7e-2, rtol=5e-2), "mismatch vs JAX reference"
    print("KERNEL_OK")
</pallas_src>

<mosaic_0001>
module attributes {stable_mosaic.version = 11 : i64} {
  func.func @_attention_kernel(%arg0: i32, %arg1: memref<1x8x32xbf16, #tpu.memory_space<vmem>>, %arg2: memref<32x96xbf16, #tpu.memory_space<vmem>>, %arg3: memref<1x96xf32, #tpu.memory_space<vmem>>, %arg4: memref<32x32xbf16, #tpu.memory_space<vmem>>, %arg5: memref<1x32xf32, #tpu.memory_space<vmem>>, %arg6: memref<1x8x32xf32, #tpu.memory_space<vmem>>, %arg7: memref<8x32xf32, #tpu.memory_space<vmem>>) attributes {dimension_semantics = [#tpu.dimension_semantics<parallel>], iteration_bounds = array<i64: 2>, scalar_prefetch = 0 : i64, scratch_operands = 1 : i64, tpu.core_type = #tpu.core_type<tc>, window_params = [{transform_indices = @transform_0, window_bounds = array<i64: 1, 8, 32>}, {pipeline_mode = #tpu.pipeline_mode<synchronous>, transform_indices = @transform_1, window_bounds = array<i64: 32, 96>}, {pipeline_mode = #tpu.pipeline_mode<synchronous>, transform_indices = @transform_2, window_bounds = array<i64: 1, 96>}, {pipeline_mode = #tpu.pipeline_mode<synchronous>, transform_indices = @transform_3, window_bounds = array<i64: 32, 32>}, {pipeline_mode = #tpu.pipeline_mode<synchronous>, transform_indices = @transform_4, window_bounds = array<i64: 1, 32>}, {transform_indices = @transform_5, window_bounds = array<i64: 1, 8, 32>}]} {
    %c0 = arith.constant 0 : index
    %c0_0 = arith.constant 0 : index
    %c0_1 = arith.constant 0 : index
    %0 = vector.load %arg1[%c0, %c0_0, %c0_1] : memref<1x8x32xbf16, #tpu.memory_space<vmem>>, vector<1x8x32xbf16>
    %1 = vector.shape_cast %0 : vector<1x8x32xbf16> to vector<8x32xbf16>
    %c0_2 = arith.constant 0 : index
    %c0_3 = arith.constant 0 : index
    %2 = vector.load %arg2[%c0_2, %c0_3] : memref<32x96xbf16, #tpu.memory_space<vmem>>, vector<32x96xbf16>
    %cst = arith.constant dense<0.000000e+00> : vector<8x96xf32>
    %3 = tpu.matmul %1, %2, %cst {dimension_numbers = #tpu.dot_dimension_numbers<[1], [0], [0], [1], [0, 0, 1, 1], [], []>} : vector<8x32xbf16>, vector<32x96xbf16>, vector<8x96xf32> -> vector<8x96xf32>
    %c0_4 = arith.constant 0 : index
    %c0_5 = arith.constant 0 : index
    %4 = vector.load %arg3[%c0_4, %c0_5] : memref<1x96xf32, #tpu.memory_space<vmem>>, vector<1x96xf32>
    %5 = vector.broadcast %4 : vector<1x96xf32> to vector<8x96xf32>
    %6 = arith.addf %3, %5 : vector<8x96xf32>
    %7 = arith.truncf %6 : vector<8x96xf32> to vector<8x96xbf16>
    %8 = vector.shape_cast %7 : vector<8x96xbf16> to vector<1x8x96xbf16>
    %c0_6 = arith.constant 0 : index
    %c0_7 = arith.constant 0 : index
    %9 = vector.load %arg5[%c0_6, %c0_7] : memref<1x32xf32, #tpu.memory_space<vmem>>, vector<1x32xf32>
    %10 = vector.shape_cast %9 : vector<1x32xf32> to vector<1x32xf32>
    %11 = vector.broadcast %10 : vector<1x32xf32> to vector<8x32xf32>
    %c0_8 = arith.constant 0 : index
    %c0_9 = arith.constant 0 : index
    %12 = vector.load %arg7[%c0_8, %c0_9] : memref<8x32xf32, #tpu.memory_space<vmem>>, vector<8x32xf32>
    tpu.vector_store %arg7[%c0_8, %c0_9], %11 {strides = array<i32>} : memref<8x32xf32, #tpu.memory_space<vmem>>, vector<8x32xf32>,
    %13 = vector.extract_strided_slice %8 {offsets = [0, 0, 0], sizes = [1, 8, 8], strides = [1, 1, 1]} : vector<1x8x96xbf16> to vector<1x8x8xbf16>
    %14 = vector.extract_strided_slice %8 {offsets = [0, 0, 32], sizes = [1, 8, 8], strides = [1, 1, 1]} : vector<1x8x96xbf16> to vector<1x8x8xbf16>
    %15 = vector.extract_strided_slice %8 {offsets = [0, 0, 64], sizes = [1, 8, 8], strides = [1, 1, 1]} : vector<1x8x96xbf16> to vector<1x8x8xbf16>
    "tpu.trace_start"() <{level = 10 : i32, message = "bqd,bkd->bqk"}> : () -> ()
    %cst_10 = arith.constant dense<0.000000e+00> : vector<1x8x8xf32>
    %16 = tpu.matmul %13, %14, %cst_10 {dimension_numbers = #tpu.dot_dimension_numbers<[2], [2], [1], [1], [0, 0, 0, 1, 1, 1], [0], [0]>} : vector<1x8x8xbf16>, vector<1x8x8xbf16>, vector<1x8x8xf32> -> vector<1x8x8xf32>
    "tpu.trace_stop"() : () -> ()
    %cst_11 = arith.constant dense<0xFF800000> : vector<1x8xf32>
    %17 = vector.multi_reduction <maximumf>, %16, %cst_11 [2] : vector<1x8x8xf32> to vector<1x8xf32>
    %18 = vector.shape_cast %17 : vector<1x8xf32> to vector<1x8x1xf32>
    %19 = vector.broadcast %18 : vector<1x8x1xf32> to vector<1x8x8xf32>
    %20 = arith.subf %16, %19 : vector<1x8x8xf32>
    %21 = math.exp %20 : vector<1x8x8xf32>
    %cst_12 = arith.constant dense<0.000000e+00> : vector<1x8xf32>
    %22 = vector.multi_reduction <add>, %21, %cst_12 [2] : vector<1x8x8xf32> to vector<1x8xf32>
    %23 = vector.shape_cast %22 : vector<1x8xf32> to vector<1x8x1xf32>
    %24 = arith.truncf %21 : vector<1x8x8xf32> to vector<1x8x8xbf16>
    "tpu.trace_start"() <{level = 10 : i32, message = "bqk,bkd->bqd"}> : () -> ()
    %cst_13 = arith.constant dense<0.000000e+00> : vector<1x8x8xf32>
    %25 = tpu.matmul %24, %15, %cst_13 {dimension_numbers = #tpu.dot_dimension_numbers<[2], [1], [1], [2], [0, 0, 0, 1, 1, 2], [0], [0]>} : vector<1x8x8xbf16>, vector<1x8x8xbf16>, vector<1x8x8xf32> -> vector<1x8x8xf32>
    "tpu.trace_stop"() : () -> ()
    %26 = tpu.reciprocal %23 {approx = true} : vector<1x8x1xf32> -> vector<1x8x1xf32>
    %27 = vector.broadcast %26 : vector<1x8x1xf32> to vector<1x8x8xf32>
    %28 = arith.mulf %25, %27 : vector<1x8x8xf32>
    %29 = arith.truncf %28 : vector<1x8x8xf32> to vector<1x8x8xbf16>
    %c0_14 = arith.constant 0 : index
    %c0_15 = arith.constant 0 : index
    %30 = vector.load %arg7[%c0_14, %c0_15] : memref<8x32xf32, #tpu.memory_space<vmem>>, vector<8x32xf32>
    %31 = vector.shape_cast %29 : vector<1x8x8xbf16> to vector<8x8xbf16>
    %c0_16 = arith.constant 0 : index
    %c0_17 = arith.constant 0 : index
    %32 = vector.load %arg4[%c0_16, %c0_17] : memref<32x32xbf16, #tpu.memory_space<vmem>>, vector<8x32xbf16>
    %cst_18 = arith.constant dense<0.000000e+00> : vector<8x32xf32>
    %33 = tpu.matmul %31, %32, %cst_18 {dimension_numbers = #tpu.dot_dimension_numbers<[1], [0], [0], [1], [0, 0, 1, 1], [], []>} : vector<8x8xbf16>, vector<8x32xbf16>, vector<8x32xf32> -> vector<8x32xf32>
    %34 = arith.addf %30, %33 : vector<8x32xf32>
    %c0_19 = arith.constant 0 : index
    %c0_20 = arith.constant 0 : index
    %35 = vector.load %arg7[%c0_19, %c0_20] : memref<8x32xf32, #tpu.memory_space<vmem>>, vector<8x32xf32>
    tpu.vector_store %arg7[%c0_19, %c0_20], %34 {strides = array<i32>} : memref<8x32xf32, #tpu.memory_space<vmem>>, vector<8x32xf32>,
    %36 = vector.extract_strided_slice %8 {offsets = [0, 0, 8], sizes = [1, 8, 8], strides = [1, 1, 1]} : vector<1x8x96xbf16> to vector<1x8x8xbf16>
    %37 = vector.extract_strided_slice %8 {offsets = [0, 0, 40], sizes = [1, 8, 8], strides = [1, 1, 1]} : vector<1x8x96xbf16> to vector<1x8x8xbf16>
    %38 = vector.extract_strided_slice %8 {offsets = [0, 0, 72], sizes = [1, 8, 8], strides = [1, 1, 1]} : vector<1x8x96xbf16> to vector<1x8x8xbf16>
    "tpu.trace_start"() <{level = 10 : i32, message = "bqd,bkd->bqk"}> : () -> ()
    %cst_21 = arith.constant dense<0.000000e+00> : vector<1x8x8xf32>
    %39 = tpu.matmul %36, %37, %cst_21 {dimension_numbers = #tpu.dot_dimension_numbers<[2], [2], [1], [1], [0, 0, 0, 1, 1, 1], [0], [0]>} : vector<1x8x8xbf16>, vector<1x8x8xbf16>, vector<1x8x8xf32> -> vector<1x8x8xf32>
    "tpu.trace_stop"() : () -> ()
    %cst_22 = arith.constant dense<0xFF800000> : vector<1x8xf32>
    %40 = vector.multi_reduction <maximumf>, %39, %cst_22 [2] : vector<1x8x8xf32> to vector<1x8xf32>
    %41 = vector.shape_cast %40 : vector<1x8xf32> to vector<1x8x1xf32>
    %42 = vector.broadcast %41 : vector<1x8x1xf32> to vector<1x8x8xf32>
    %43 = arith.subf %39, %42 : vector<1x8x8xf32>
    %44 = math.exp %43 : vector<1x8x8xf32>
    %cst_23 = arith.constant dense<0.000000e+00> : vector<1x8xf32>
    %45 = vector.multi_reduction <add>, %44, %cst_23 [2] : vector<1x8x8xf32> to vector<1x8xf32>
    %46 = vector.shape_cast %45 : vector<1x8xf32> to vector<1x8x1xf32>
    %47 = arith.truncf %44 : vector<1x8x8xf32> to vector<1x8x8xbf16>
    "tpu.trace_start"() <{level = 10 : i32, message = "bqk,bkd->bqd"}> : () -> ()
    %cst_24 = arith.constant dense<0.000000e+00> : vector<1x8x8xf32>
    %48 = tpu.matmul %47, %38, %cst_24 {dimension_numbers = #tpu.dot_dimension_numbers<[2], [1], [1], [2], [0, 0, 0, 1, 1, 2], [0], [0]>} : vector<1x8x8xbf16>, vector<1x8x8xbf16>, vector<1x8x8xf32> -> vector<1x8x8xf32>
    "tpu.trace_stop"() : () -> ()
    %49 = tpu.reciprocal %46 {approx = true} : vector<1x8x1xf32> -> vector<1x8x1xf32>
    %50 = vector.broadcast %49 : vector<1x8x1xf32> to vector<1x8x8xf32>
    %51 = arith.mulf %48, %50 : vector<1x8x8xf32>
    %52 = arith.truncf %51 : vector<1x8x8xf32> to vector<1x8x8xbf16>
    %c0_25 = arith.constant 0 : index
    %c0_26 = arith.constant 0 : index
    %53 = vector.load %arg7[%c0_25, %c0_26] : memref<8x32xf32, #tpu.memory_space<vmem>>, vector<8x32xf32>
    %54 = vector.shape_cast %52 : vector<1x8x8xbf16> to vector<8x8xbf16>
    %c8 = arith.constant 8 : index
    %c0_27 = arith.constant 0 : index
    %55 = vector.load %arg4[%c8, %c0_27] : memref<32x32xbf16, #tpu.memory_space<vmem>>, vector<8x32xbf16>
    %cst_28 = arith.constant dense<0.000000e+00> : vector<8x32xf32>
    %56 = tpu.matmul %54, %55, %cst_28 {dimension_numbers = #tpu.dot_dimension_numbers<[1], [0], [0], [1], [0, 0, 1, 1], [], []>} : vector<8x8xbf16>, vector<8x32xbf16>, vector<8x32xf32> -> vector<8x32xf32>
    %57 = arith.addf %53, %56 : vector<8x32xf32>
    %c0_29 = arith.constant 0 : index
    %c0_30 = arith.constant 0 : index
    %58 = vector.load %arg7[%c0_29, %c0_30] : memref<8x32xf32, #tpu.memory_space<vmem>>, vector<8x32xf32>
    tpu.vector_store %arg7[%c0_29, %c0_30], %57 {strides = array<i32>} : memref<8x32xf32, #tpu.memory_space<vmem>>, vector<8x32xf32>,
    %59 = vector.extract_strided_slice %8 {offsets = [0, 0, 16], sizes = [1, 8, 8], strides = [1, 1, 1]} : vector<1x8x96xbf16> to vector<1x8x8xbf16>
    %60 = vector.extract_strided_slice %8 {offsets = [0, 0, 48], sizes = [1, 8, 8], strides = [1, 1, 1]} : vector<1x8x96xbf16> to vector<1x8x8xbf16>
    %61 = vector.extract_strided_slice %8 {offsets = [0, 0, 80], sizes = [1, 8, 8], strides = [1, 1, 1]} : vector<1x8x96xbf16> to vector<1x8x8xbf16>
    "tpu.trace_start"() <{level = 10 : i32, message = "bqd,bkd->bqk"}> : () -> ()
    %cst_31 = arith.constant dense<0.000000e+00> : vector<1x8x8xf32>
    %62 = tpu.matmul %59, %60, %cst_31 {dimension_numbers = #tpu.dot_dimension_numbers<[2], [2], [1], [1], [0, 0, 0, 1, 1, 1], [0], [0]>} : vector<1x8x8xbf16>, vector<1x8x8xbf16>, vector<1x8x8xf32> -> vector<1x8x8xf32>
    "tpu.trace_stop"() : () -> ()
    %cst_32 = arith.constant dense<0xFF800000> : vector<1x8xf32>
    %63 = vector.multi_reduction <maximumf>, %62, %cst_32 [2] : vector<1x8x8xf32> to vector<1x8xf32>
    %64 = vector.shape_cast %63 : vector<1x8xf32> to vector<1x8x1xf32>
    %65 = vector.broadcast %64 : vector<1x8x1xf32> to vector<1x8x8xf32>
    %66 = arith.subf %62, %65 : vector<1x8x8xf32>
    %67 = math.exp %66 : vector<1x8x8xf32>
    %cst_33 = arith.constant dense<0.000000e+00> : vector<1x8xf32>
    %68 = vector.multi_reduction <add>, %67, %cst_33 [2] : vector<1x8x8xf32> to vector<1x8xf32>
    %69 = vector.shape_cast %68 : vector<1x8xf32> to vector<1x8x1xf32>
    %70 = arith.truncf %67 : vector<1x8x8xf32> to vector<1x8x8xbf16>
    "tpu.trace_start"() <{level = 10 : i32, message = "bqk,bkd->bqd"}> : () -> ()
    %cst_34 = arith.constant dense<0.000000e+00> : vector<1x8x8xf32>
    %71 = tpu.matmul %70, %61, %cst_34 {dimension_numbers = #tpu.dot_dimension_numbers<[2], [1], [1], [2], [0, 0, 0, 1, 1, 2], [0], [0]>} : vector<1x8x8xbf16>, vector<1x8x8xbf16>, vector<1x8x8xf32> -> vector<1x8x8xf32>
    "tpu.trace_stop"() : () -> ()
    %72 = tpu.reciprocal %69 {approx = true} : vector<1x8x1xf32> -> vector<1x8x1xf32>
    %73 = vector.broadcast %72 : vector<1x8x1xf32> to vector<1x8x8xf32>
    %74 = arith.mulf %71, %73 : vector<1x8x8xf32>
    %75 = arith.truncf %74 : vector<1x8x8xf32> to vector<1x8x8xbf16>
    %c0_35 = arith.constant 0 : index
    %c0_36 = arith.constant 0 : index
    %76 = vector.load %arg7[%c0_35, %c0_36] : memref<8x32xf32, #tpu.memory_space<vmem>>, vector<8x32xf32>
    %77 = vector.shape_cast %75 : vector<1x8x8xbf16> to vector<8x8xbf16>
    %c16 = arith.constant 16 : index
    %c0_37 = arith.constant 0 : index
    %78 = vector.load %arg4[%c16, %c0_37] : memref<32x32xbf16, #tpu.memory_space<vmem>>, vector<8x32xbf16>
    %cst_38 = arith.constant dense<0.000000e+00> : vector<8x32xf32>
    %79 = tpu.matmul %77, %78, %cst_38 {dimension_numbers = #tpu.dot_dimension_numbers<[1], [0], [0], [1], [0, 0, 1, 1], [], []>} : vector<8x8xbf16>, vector<8x32xbf16>, vector<8x32xf32> -> vector<8x32xf32>
    %80 = arith.addf %76, %79 : vector<8x32xf32>
    %c0_39 = arith.constant 0 : index
    %c0_40 = arith.constant 0 : index
    %81 = vector.load %arg7[%c0_39, %c0_40] : memref<8x32xf32, #tpu.memory_space<vmem>>, vector<8x32xf32>
    tpu.vector_store %arg7[%c0_39, %c0_40], %80 {strides = array<i32>} : memref<8x32xf32, #tpu.memory_space<vmem>>, vector<8x32xf32>,
    %82 = vector.extract_strided_slice %8 {offsets = [0, 0, 24], sizes = [1, 8, 8], strides = [1, 1, 1]} : vector<1x8x96xbf16> to vector<1x8x8xbf16>
    %83 = vector.extract_strided_slice %8 {offsets = [0, 0, 56], sizes = [1, 8, 8], strides = [1, 1, 1]} : vector<1x8x96xbf16> to vector<1x8x8xbf16>
    %84 = vector.extract_strided_slice %8 {offsets = [0, 0, 88], sizes = [1, 8, 8], strides = [1, 1, 1]} : vector<1x8x96xbf16> to vector<1x8x8xbf16>
    "tpu.trace_start"() <{level = 10 : i32, message = "bqd,bkd->bqk"}> : () -> ()
    %cst_41 = arith.constant dense<0.000000e+00> : vector<1x8x8xf32>
    %85 = tpu.matmul %82, %83, %cst_41 {dimension_numbers = #tpu.dot_dimension_numbers<[2], [2], [1], [1], [0, 0, 0, 1, 1, 1], [0], [0]>} : vector<1x8x8xbf16>, vector<1x8x8xbf16>, vector<1x8x8xf32> -> vector<1x8x8xf32>
    "tpu.trace_stop"() : () -> ()
    %cst_42 = arith.constant dense<0xFF800000> : vector<1x8xf32>
    %86 = vector.multi_reduction <maximumf>, %85, %cst_42 [2] : vector<1x8x8xf32> to vector<1x8xf32>
    %87 = vector.shape_cast %86 : vector<1x8xf32> to vector<1x8x1xf32>
    %88 = vector.broadcast %87 : vector<1x8x1xf32> to vector<1x8x8xf32>
    %89 = arith.subf %85, %88 : vector<1x8x8xf32>
    %90 = math.exp %89 : vector<1x8x8xf32>
    %cst_43 = arith.constant dense<0.000000e+00> : vector<1x8xf32>
    %91 = vector.multi_reduction <add>, %90, %cst_43 [2] : vector<1x8x8xf32> to vector<1x8xf32>
    %92 = vector.shape_cast %91 : vector<1x8xf32> to vector<1x8x1xf32>
    %93 = arith.truncf %90 : vector<1x8x8xf32> to vector<1x8x8xbf16>
    "tpu.trace_start"() <{level = 10 : i32, message = "bqk,bkd->bqd"}> : () -> ()
    %cst_44 = arith.constant dense<0.000000e+00> : vector<1x8x8xf32>
    %94 = tpu.matmul %93, %84, %cst_44 {dimension_numbers = #tpu.dot_dimension_numbers<[2], [1], [1], [2], [0, 0, 0, 1, 1, 2], [0], [0]>} : vector<1x8x8xbf16>, vector<1x8x8xbf16>, vector<1x8x8xf32> -> vector<1x8x8xf32>
    "tpu.trace_stop"() : () -> ()
    %95 = tpu.reciprocal %92 {approx = true} : vector<1x8x1xf32> -> vector<1x8x1xf32>
    %96 = vector.broadcast %95 : vector<1x8x1xf32> to vector<1x8x8xf32>
    %97 = arith.mulf %94, %96 : vector<1x8x8xf32>
    %98 = arith.truncf %97 : vector<1x8x8xf32> to vector<1x8x8xbf16>
    %c0_45 = arith.constant 0 : index
    %c0_46 = arith.constant 0 : index
    %99 = vector.load %arg7[%c0_45, %c0_46] : memref<8x32xf32, #tpu.memory_space<vmem>>, vector<8x32xf32>
    %100 = vector.shape_cast %98 : vector<1x8x8xbf16> to vector<8x8xbf16>
    %c24 = arith.constant 24 : index
    %c0_47 = arith.constant 0 : index
    %101 = vector.load %arg4[%c24, %c0_47] : memref<32x32xbf16, #tpu.memory_space<vmem>>, vector<8x32xbf16>
    %cst_48 = arith.constant dense<0.000000e+00> : vector<8x32xf32>
    %102 = tpu.matmul %100, %101, %cst_48 {dimension_numbers = #tpu.dot_dimension_numbers<[1], [0], [0], [1], [0, 0, 1, 1], [], []>} : vector<8x8xbf16>, vector<8x32xbf16>, vector<8x32xf32> -> vector<8x32xf32>
    %103 = arith.addf %99, %102 : vector<8x32xf32>
    %c0_49 = arith.constant 0 : index
    %c0_50 = arith.constant 0 : index
    %104 = vector.load %arg7[%c0_49, %c0_50] : memref<8x32xf32, #tpu.memory_space<vmem>>, vector<8x32xf32>
    tpu.vector_store %arg7[%c0_49, %c0_50], %103 {strides = array<i32>} : memref<8x32xf32, #tpu.memory_space<vmem>>, vector<8x32xf32>,
    %c0_51 = arith.constant 0 : index
    %c0_52 = arith.constant 0 : index
    %105 = vector.load %arg7[%c0_51, %c0_52] : memref<8x32xf32, #tpu.memory_space<vmem>>, vector<8x32xf32>
    %106 = vector.shape_cast %105 : vector<8x32xf32> to vector<1x8x32xf32>
    %c0_53 = arith.constant 0 : index
    %c0_54 = arith.constant 0 : index
    %c0_55 = arith.constant 0 : index
    %107 = vector.load %arg6[%c0_53, %c0_54, %c0_55] : memref<1x8x32xf32, #tpu.memory_space<vmem>>, vector<1x8x32xf32>
    tpu.vector_store %arg6[%c0_53, %c0_54, %c0_55], %106 {strides = array<i32>} : memref<1x8x32xf32, #tpu.memory_space<vmem>>, vector<1x8x32xf32>,
    return
  }
  func.func @transform_0(%arg0: i32) -> (i32, i32, i32) {
    %c0_i32 = arith.constant 0 : i32
    %c0_i32_0 = arith.constant 0 : i32
    %c0_i32_1 = arith.constant 0 : i32
    return %arg0, %c0_i32, %c0_i32_0 : i32, i32, i32
  }
  func.func @transform_1(%arg0: i32) -> (i32, i32) {
    %c0_i32 = arith.constant 0 : i32
    %c0_i32_0 = arith.constant 0 : i32
    %c0_i32_1 = arith.constant 0 : i32
    return %c0_i32, %c0_i32_0 : i32, i32
  }
  func.func @transform_2(%arg0: i32) -> (i32, i32) {
    %c0_i32 = arith.constant 0 : i32
    %c0_i32_0 = arith.constant 0 : i32
    %c0_i32_1 = arith.constant 0 : i32
    return %c0_i32, %c0_i32_0 : i32, i32
  }
  func.func @transform_3(%arg0: i32) -> (i32, i32) {
    %c0_i32 = arith.constant 0 : i32
    %c0_i32_0 = arith.constant 0 : i32
    %c0_i32_1 = arith.constant 0 : i32
    return %c0_i32, %c0_i32_0 : i32, i32
  }
  func.func @transform_4(%arg0: i32) -> (i32, i32) {
    %c0_i32 = arith.constant 0 : i32
    %c0_i32_0 = arith.constant 0 : i32
    %c0_i32_1 = arith.constant 0 : i32
    return %c0_i32, %c0_i32_0 : i32, i32
  }
  func.func @transform_5(%arg0: i32) -> (i32, i32, i32) {
    %c0_i32 = arith.constant 0 : i32
    %c0_i32_0 = arith.constant 0 : i32
    %c0_i32_1 = arith.constant 0 : i32
    return %arg0, %c0_i32, %c0_i32_0 : i32, i32, i32
  }
}

</mosaic_0001>

<llo_original>
// kernel: tpu_custom_call.1
$region0: #{tpu_custom_call.1}
  #allocation0 [shape = 'u32[]', space=smem, size = 0x4, offset = 0x4, fixed_abs, tag = 'smem constant byte address 0x4 - core index']
  #allocation1 [shape = 'u32[144,128]{1,0:T(1,128)}', space=vmem, size = 0x12000, scoped, tag = 'internal scratch']
  #allocation2 [shape = 'f32[8,32]{1,0:T(8,128)}', space=vmem, size = 0x1000, scoped, tag = 'scratch operand']
  %s0 = inlined_call_operand.hbm [shape: bf16[2,8,32], index: 0, kind: input, shape index: {}]
  %s1 = inlined_call_operand.hbm [shape: bf16[32,96], index: 1, kind: input, shape index: {}]
  %s2 = inlined_call_operand.vmem [shape: f32[1,96], index: 2, kind: input, shape index: {}]
  %s3 = inlined_call_operand.hbm [shape: bf16[32,32], index: 3, kind: input, shape index: {}]
  %s4 = inlined_call_operand.vmem [shape: f32[1,32], index: 4, kind: input, shape index: {}]
  %s5 = inlined_call_operand.hbm [shape: f32[2,8,32], index: 5, kind: output, shape index: {}]
  %s6 = sld [smem:[#allocation0]]
  $region65: #{tpu_custom_call.1} parent=0
    _
  %s8 = ssub.s32 1, %s6
  %s9 = scalar_select 0, %s8, %s6
  $region1: #{tpu_custom_call.1} parent=0
    #allocation3 [shape = 'u8[4096]{0}', space=vmem, size = 0x1000, scoped, tag = 'input window, operand 0']
    #allocation4 [shape = 's32[2]{0}', space=sflag, size = 0x8, scoped, tag = 'scoped memory for tpu_custom_call.1']
    #allocation5 [shape = 's32[2]{0}', space=sflag, size = 0x8, scoped, tag = 'scoped memory for tpu_custom_call.1']
    #allocation6 [shape = 'u8[8192]{0}', space=vmem, size = 0x2000, scoped, tag = 'input window, operand 1, single buffered']
    #allocation7 [shape = 's32[1]{0}', space=sflag, size = 0x4, scoped, tag = 'scoped memory for tpu_custom_call.1']
    #allocation8 [shape = 'u8[8192]{0}', space=vmem, size = 0x2000, scoped, tag = 'input window, operand 3, single buffered']
    #allocation9 [shape = 'u8[8192]{0}', space=vmem, size = 0x2000, scoped, tag = 'output window, operand 0']
    %10 = vsyncpa [#allocation4], 0
    %s11 = scalar_lea.sflag [#allocation4], 1
    %12 = vsyncpa %s11, 0
    %13 = vsyncpa [#allocation7], 0
    %14 = vsyncpa [#allocation5], 0
    %s15 = scalar_lea.sflag [#allocation5], 1
    %16 = vsyncpa %s15, 0
    loop: start=0, step=1, limit=4
    $region2: #{tpu_custom_call.1} parent=1 // loop_pre_header
      _
    $region3: #{tpu_custom_call.1} parent=1 // loop_header
      %s18 = sphi 0, %s22
      %p19 = scmp.ge.s32.totalorder %s18, 4
      %s28 = sphi 0, %s30
      %s31 = sphi 0, %s28
      %s32 = sphi 0, %s31
      %s48 = sphi 0, %s32
      %s52 = sphi 0, %s52
      %s54 = sphi 0, %s52
      %s55 = sphi 0, %s54
      %s69 = sphi 0, %s55
      %s73 = sphi 0, %s73
      %s75 = sphi 0, %s73
      %s76 = sphi 0, %s75
      %s90 = sphi 0, %s76
      %s94 = sphi 0, %s94
      %s96 = sphi 0, %s94
      %s97 = sphi 0, %s96
      %s111 = sphi 0, %s97
      %s115 = sphi 0, %s115
      %s117 = sphi 0, %s115
      %s118 = sphi 0, %s117
      %s132 = sphi 0, %s118
      %s138 = sphi 0, %s140
      %s141 = sphi 0, %s138
      %s142 = sphi 0, %s141
      %s158 = sphi 0, %s142
    $region4: #{tpu_custom_call.1} parent=1 // loop_header_branch
      %21 = sbr.rel (%p19) target = $region8
    $region5: #{tpu_custom_call.1} parent=1 // loop_body
      %s23 = ssub.s32 %s18, 1
      %s24 = ssub.s32 %s18, 2
      %s25 = sadd.s32 %s18, 1
      %s26 = ssub.s32 %s18, %s25
      %p27 = scmp.eq.s32.totalorder %s26, 0
      %s29 = sadd.s32 %s28, 1
      %s30 = scalar_select %p27, %s28, %s29
      %p33 = pneg %p27
      %p34 = scmp.eq.s32.totalorder %s18, 1
      %p35 = por %p33, %p34
      %p36 = scmp.ne.s32.totalorder %s28, %s31
      %p37 = scmp.eq.s32.totalorder %s18, 0
      %p38 = por %p36, %p37
      %p39 = scmp.ne.s32.totalorder %s28, %s31
      %p40 = scmp.eq.s32.totalorder %s23, 1
      %p41 = por %p39, %p40
      %p42 = scmp.ne.s32.totalorder %s31, %s32
      %p43 = scmp.eq.s32.totalorder %s23, 0
      %p44 = por %p42, %p43
      %p45 = scmp.ne.s32.totalorder %s31, %s32
      %p46 = scmp.eq.s32.totalorder %s24, 1
      %p47 = por %p45, %p46
      %p49 = scmp.ne.s32.totalorder %s32, %s48
      %p50 = scmp.eq.s32.totalorder %s24, 0
      %p51 = por %p49, %p50
      %s53 = sadd.s32 %s52, 1
      %p56 = scmp.eq.s32.totalorder %s18, 1
      %p57 = scmp.ne.s32.totalorder %s52, %s54
      %p58 = scmp.eq.s32.totalorder %s18, 0
      %p59 = por %p57, %p58
      %p60 = scmp.ne.s32.totalorder %s52, %s54
      %p61 = scmp.eq.s32.totalorder %s23, 1
      %p62 = por %p60, %p61
      %p63 = scmp.ne.s32.totalorder %s54, %s55
      %p64 = scmp.eq.s32.totalorder %s23, 0
      %p65 = por %p63, %p64
      %p66 = scmp.ne.s32.totalorder %s54, %s55
      %p67 = scmp.eq.s32.totalorder %s24, 1
      %p68 = por %p66, %p67
      %p70 = scmp.ne.s32.totalorder %s55, %s69
      %p71 = scmp.eq.s32.totalorder %s24, 0
      %p72 = por %p70, %p71
      %s74 = sadd.s32 %s73, 1
      %p77 = scmp.eq.s32.totalorder %s18, 1
      %p78 = scmp.ne.s32.totalorder %s73, %s75
      %p79 = scmp.eq.s32.totalorder %s18, 0
      %p80 = por %p78, %p79
      %p81 = scmp.ne.s32.totalorder %s73, %s75
      %p82 = scmp.eq.s32.totalorder %s23, 1
      %p83 = por %p81, %p82
      %p84 = scmp.ne.s32.totalorder %s75, %s76
      %p85 = scmp.eq.s32.totalorder %s23, 0
      %p86 = por %p84, %p85
      %p87 = scmp.ne.s32.totalorder %s75, %s76
      %p88 = scmp.eq.s32.totalorder %s24, 1
      %p89 = por %p87, %p88
      %p91 = scmp.ne.s32.totalorder %s76, %s90
      %p92 = scmp.eq.s32.totalorder %s24, 0
      %p93 = por %p91, %p92
      %s95 = sadd.s32 %s94, 1
      %p98 = scmp.eq.s32.totalorder %s18, 1
      %p99 = scmp.ne.s32.totalorder %s94, %s96
      %p100 = scmp.eq.s32.totalorder %s18, 0
      %p101 = por %p99, %p100
      %p102 = scmp.ne.s32.totalorder %s94, %s96
      %p103 = scmp.eq.s32.totalorder %s23, 1
      %p104 = por %p102, %p103
      %p105 = scmp.ne.s32.totalorder %s96, %s97
      %p106 = scmp.eq.s32.totalorder %s23, 0
      %p107 = por %p105, %p106
      %p108 = scmp.ne.s32.totalorder %s96, %s97
      %p109 = scmp.eq.s32.totalorder %s24, 1
      %p110 = por %p108, %p109
      %p112 = scmp.ne.s32.totalorder %s97, %s111
      %p113 = scmp.eq.s32.totalorder %s24, 0
      %p114 = por %p112, %p113
      %s116 = sadd.s32 %s115, 1
      %p119 = scmp.eq.s32.totalorder %s18, 1
      %p120 = scmp.ne.s32.totalorder %s115, %s117
      %p121 = scmp.eq.s32.totalorder %s18, 0
      %p122 = por %p120, %p121
      %p123 = scmp.ne.s32.totalorder %s115, %s117
      %p124 = scmp.eq.s32.totalorder %s23, 1
      %p125 = por %p123, %p124
      %p126 = scmp.ne.s32.totalorder %s117, %s118
      %p127 = scmp.eq.s32.totalorder %s23, 0
      %p128 = por %p126, %p127
      %p129 = scmp.ne.s32.totalorder %s117, %s118
      %p130 = scmp.eq.s32.totalorder %s24, 1
      %p131 = por %p129, %p130
      %p133 = scmp.ne.s32.totalorder %s118, %s132
      %p134 = scmp.eq.s32.totalorder %s24, 0
      %p135 = por %p133, %p134
      %s136 = ssub.s32 %s18, %s25
      %p137 = scmp.eq.s32.totalorder %s136, 0
      %s139 = sadd.s32 %s138, 1
      %s140 = scalar_select %p137, %s138, %s139
      %p143 = pneg %p137
      %p144 = scmp.eq.s32.totalorder %s18, 1
      %p145 = por %p143, %p144
      %p146 = scmp.ne.s32.totalorder %s138, %s141
      %p147 = scmp.eq.s32.totalorder %s18, 0
      %p148 = por %p146, %p147
      %p149 = scmp.ne.s32.totalorder %s138, %s141
      %p150 = scmp.eq.s32.totalorder %s23, 1
      %p151 = por %p149, %p150
      %p152 = scmp.ne.s32.totalorder %s141, %s142
      %p153 = scmp.eq.s32.totalorder %s23, 0
      %p154 = por %p152, %p153
      %p155 = scmp.ne.s32.totalorder %s141, %s142
      %p156 = scmp.eq.s32.totalorder %s24, 1
      %p157 = por %p155, %p156
      %p159 = scmp.ne.s32.totalorder %s142, %s158
      %p160 = scmp.eq.s32.totalorder %s24, 0
      %p161 = por %p159, %p160
      %p162 = scmp.le.s32.totalorder 1, %s18
      %p163 = scmp.lt.s32.totalorder %s18, 3
      %p164 = pnand %p162, %p163
      %p165 = pneg %p164
      // Predicated region
      $region9: #{tpu_custom_call.1} parent=5 // pred_check
        _
      $region10: #{tpu_custom_call.1} parent=5 // pred_check_branch
        %167 = sbr.rel (%p164) target = $region12
      $region11: #{tpu_custom_call.1} parent=5 // pred_region
        %s168 = ssub.s32 %s18, 1
        // Predicated region
        $region13: #{tpu_custom_call.1} parent=11 // pred_check
          %p169 = pneg %p65
        $region14: #{tpu_custom_call.1} parent=11 // pred_check_branch
          %171 = sbr.rel (%p169) target = $region16
        $region15: #{tpu_custom_call.1} parent=11 // pred_region
          %s173 = ssub.s32 256, 256
          %174 = vsyncadd [#allocation7], %s173
          %s175 = sshll.u32 [#allocation6], 4
          %s176 = int_to_ptr.vmem [resolvable:$true] %s175
          %181 = dma.hbm_to_vmem [thread:$0]  %s1, 256, %s176, [#allocation7], 64, 64, 4
        $region16: #{tpu_custom_call.1} parent=11 // pred_fallthru
          _
        // Predicated region
        $region17: #{tpu_custom_call.1} parent=11 // pred_check
          %p182 = pneg %p86
        $region18: #{tpu_custom_call.1} parent=11 // pred_check_branch
          %184 = sbr.rel (%p182) target = $region20
        $region19: #{tpu_custom_call.1} parent=11 // pred_region
          _
        $region20: #{tpu_custom_call.1} parent=11 // pred_fallthru
          _
        // Predicated region
        $region21: #{tpu_custom_call.1} parent=11 // pred_check
          %p185 = pneg %p107
        $region22: #{tpu_custom_call.1} parent=11 // pred_check_branch
          %187 = sbr.rel (%p185) target = $region24
        $region23: #{tpu_custom_call.1} parent=11 // pred_region
          %s189 = ssub.s32 256, 256
          %190 = vsyncadd [#allocation7], %s189
          %s191 = sshll.u32 [#allocation8], 4
          %s192 = int_to_ptr.vmem [resolvable:$true] %s191
          %197 = dma.hbm_to_vmem [thread:$0]  %s3, 256, %s192, [#allocation7], 64, 64, 4
        $region24: #{tpu_custom_call.1} parent=11 // pred_fallthru
          _
        // Predicated region
        $region25: #{tpu_custom_call.1} parent=11 // pred_check
          %p198 = pneg %p128
        $region26: #{tpu_custom_call.1} parent=11 // pred_check_branch
          %200 = sbr.rel (%p198) target = $region28
        $region27: #{tpu_custom_call.1} parent=11 // pred_region
          _
        $region28: #{tpu_custom_call.1} parent=11 // pred_fallthru
          _
      $region12: #{tpu_custom_call.1} parent=5 // pred_fallthru
        _
      %p201 = scmp.lt.s32.totalorder %s18, 2
      // Predicated region
      $region29: #{tpu_custom_call.1} parent=5 // pred_check
        %p202 = pneg %p201
      $region30: #{tpu_custom_call.1} parent=5 // pred_check_branch
        %204 = sbr.rel (%p202) target = $region32
      $region31: #{tpu_custom_call.1} parent=5 // pred_region
        // Predicated region
        $region33: #{tpu_custom_call.1} parent=31 // pred_check
          %p205 = pneg %p38
        $region34: #{tpu_custom_call.1} parent=31 // pred_check_branch
          %207 = sbr.rel (%p205) target = $region36
        $region35: #{tpu_custom_call.1} parent=31 // pred_region
          %s208 = sand.u32 %s28, 1
          %s209 = scalar_lea.sflag [#allocation4], %s208
          %s210 = sand.u32 %s28, 1
          %s211 = smul.addr %s210, 4
          %s212 = scalar_lea.vmem [#allocation3], %s211
          %s214 = ssub.s32 64, 64
          %215 = vsyncadd %s209, %s214
          %s216 = smul.addr %s18, 64
          %s217 = scalar_lea.hbm %s0, %s216
          %s219 = sshll.u32 %s212, 4
          %s220 = int_to_ptr.vmem [resolvable:$true] %s219
          %222 = dma.hbm_to_vmem [thread:$0]  %s217, 64, %s220, %s209
        $region36: #{tpu_custom_call.1} parent=31 // pred_fallthru
          _
      $region32: #{tpu_custom_call.1} parent=5 // pred_fallthru
        _
      %p223 = scmp.le.s32.totalorder 1, %s18
      %p224 = scmp.lt.s32.totalorder %s18, 3
      %p225 = pnand %p223, %p224
      %p226 = pneg %p225
      // Predicated region
      $region37: #{tpu_custom_call.1} parent=5 // pred_check
        _
      $region38: #{tpu_custom_call.1} parent=5 // pred_check_branch
        %228 = sbr.rel (%p225) target = $region40
      $region39: #{tpu_custom_call.1} parent=5 // pred_region
        %s229 = ssub.s32 %s18, 1
        %s230 = sand.u32 %s31, 1
        %s231 = scalar_lea.sflag [#allocation4], %s230
        %s232 = sand.u32 %s31, 1
        %s233 = smul.addr %s232, 4
        %s234 = scalar_lea.vmem [#allocation3], %s233
        // Predicated region
        $region41: #{tpu_custom_call.1} parent=39 // pred_check
          %p235 = pneg %p44
        $region42: #{tpu_custom_call.1} parent=39 // pred_check_branch
          %237 = sbr.rel (%p235) target = $region44
        $region43: #{tpu_custom_call.1} parent=39 // pred_region
          %238 = dma.done %s231, 64
        $region44: #{tpu_custom_call.1} parent=39 // pred_fallthru
          _
        // Predicated region
        $region45: #{tpu_custom_call.1} parent=39 // pred_check
          %p239 = pneg %p65
        $region46: #{tpu_custom_call.1} parent=39 // pred_check_branch
          %241 = sbr.rel (%p239) target = $region48
        $region47: #{tpu_custom_call.1} parent=39 // pred_region
          %242 = dma.done [#allocation7], 256
        $region48: #{tpu_custom_call.1} parent=39 // pred_fallthru
          _
        // Predicated region
        $region49: #{tpu_custom_call.1} parent=39 // pred_check
          %p243 = pneg %p107
        $region50: #{tpu_custom_call.1} parent=39 // pred_check_branch
          %245 = sbr.rel (%p243) target = $region52
        $region51: #{tpu_custom_call.1} parent=39 // pred_region
          %246 = dma.done [#allocation7], 256
        $region52: #{tpu_custom_call.1} parent=39 // pred_fallthru
          _
        %s247 = sand.u32 %s31, 1
        %s248 = scalar_lea.sflag [#allocation4], %s247
        %s249 = sand.u32 %s31, 1
        %s250 = smul.addr %s249, 4
        %s251 = scalar_lea.vmem [#allocation3], %s250
        %p252 = pneg %p44
        %p253 = pneg %p41
        %p254 = pneg %p65
        %p255 = pneg %p62
        %p256 = pneg %p86
        %p257 = pneg %p83
        %p258 = pneg %p107
        %p259 = pneg %p104
        %p260 = pneg %p128
        %p261 = pneg %p125
        %p262 = pneg %p154
        %p263 = pneg %p151
        %s264 = sand.u32 %s141, 1
        %s265 = scalar_lea.sflag [#allocation5], %s264
        %s266 = sand.u32 %s141, 1
        %s267 = smul.addr %s266, 8
        %s268 = scalar_lea.vmem [#allocation9], %s267
        %v270 = vld [vmem:[%s234] sm:$0xf]
        %v271 = vld [vmem:[#allocation6] sm:$0xf]
        %v272 = vld [vmem:[#allocation6 + $0x4] sm:$0xf]
        %v273 = vld [vmem:[#allocation6 + $0x8] sm:$0xf]
        %v274 = vld [vmem:[#allocation6 + $0xc] sm:$0xf]
        %v275 = vld [vmem:[%s2] sm:$0x1]
        %v277 = vlaneseq
        %v278 = vshrl.u32 %v277, 7
        %v279 = vsub.s32 0, %v278
        %v280 = vrot.slane %v275, %v279
        %v286 = vunpack.c.l.b16 %v271
        %v287 = vunpack.c.l.b16 %v272
        %v288 = vunpack.c.l.b16 %v273
        %v289 = vunpack.c.l.b16 %v274
        %v290 = vpack.c.b16 %v287, %v286
        %v291 = vpack.c.b16 %v289, %v288
        %vm294 = vcmask 261120
        %v296 = vsel %vm294, %v270, 0
        %298 = vmatprep.subr.bf16.mxu0 0
        %299 = vmatpush1.bf16.msra.mxu0 0
        %300 = vmatprep.subr.bf16.mxu0 0
        %301 = vmatpush1.bf16.msra.mxu0 0
        %302 = vmatprep.subr.bf16.mxu0 0
        %303 = vmatpush1.bf16.msra.mxu0 0
        %304 = vmatprep.subr.bf16.mxu0 0
        %305 = vmatpush1.bf16.msra.mxu0 0
        %306 = vmatprep.subr.bf16.mxu0 0
        %307 = vmatpush1.bf16.msra.mxu0 0
        %308 = vmatprep.subr.bf16.mxu0 0
        %309 = vmatpush1.bf16.msra.mxu0 0
        %310 = vmatprep.subr.bf16.mxu0 0
        %311 = vmatpush1.bf16.msra.mxu0 %v291
        %312 = vmatprep.subr.bf16.mxu0 0
        %313 = vmatpush1.bf16.msra.mxu0 %v290
        %314 = vmatprep.subr.bf16.mxu0 0
        %315 = vmatpush2.bf16.msra.mxu0 0
        %316 = vmatprep.subr.bf16.mxu0 0
        %317 = vmatpush2.bf16.msra.mxu0 0
        %318 = vmatprep.subr.bf16.mxu0 0
        %319 = vmatpush2.bf16.msra.mxu0 0
        %320 = vmatprep.subr.bf16.mxu0 0
        %321 = vmatpush2.bf16.msra.mxu0 0
        %322 = vmatprep.subr.bf16.mxu0 0
        %323 = vmatpush2.bf16.msra.mxu0 0
        %324 = vmatprep.subr.bf16.mxu0 0
        %325 = vmatpush2.bf16.msra.mxu0 0
        %326 = vmatprep.subr.bf16.mxu0 0
        %327 = vmatpush2.bf16.msra.mxu0 0
        %328 = vmatprep.subr.bf16.mxu0 0
        %329 = vmatpush2.bf16.msra.mxu0 0
        %330 = vmatprep.mubr.bf16.mxu0 0
        %331 = vmatmul.mubr.bf16.gmra.mxu0 %v296
        %v332 = vpop.f32.mrf.mxu0
        %v333 = vadd.f32 %v280, %v332
        %v334 = vpop.f32.mrf.mxu0
        %v335 = vpop.f32.mrf.mxu0
        %v336 = vpop.f32.mrf.mxu0
        %337 = vdwg.mxu0
        %v338 = vpack.c.bf16 %v333, %v333
        %v339 = vld [vmem:[%s4] sm:$0x1]
        %v341 = vlaneseq
        %v342 = vshrl.u32 %v341, 7
        %v343 = vsub.s32 0, %v342
        %v344 = vrot.slane %v339, %v343
        %346 = vst.msk [vmem:[#allocation2] sm:$0xff] %vm294, %v344
        %348 = vrot.lane.b32.xlu0 %v338, 96
        %v349 = vpop.permute.xlu0 %348
        %vm350 = vcmask 64512
        %v352 = vsel %vm350, %v338, 0
        %v355 = vsel %vm350, %v349, 0
        %357 = vmatprep.subr.bf16.mxu0 0
        %358 = vmatpush1.bf16.xpose.msra.mxu0 0
        %359 = vmatprep.subr.bf16.mxu0 0
        %360 = vmatpush1.bf16.xpose.msra.mxu0 0
        %361 = vmatprep.subr.bf16.mxu0 0
        %362 = vmatpush1.bf16.xpose.msra.mxu0 0
        %363 = vmatprep.subr.bf16.mxu0 0
        %364 = vmatpush1.bf16.xpose.msra.mxu0 0
        %365 = vmatprep.subr.bf16.mxu0 0
        %366 = vmatpush1.bf16.xpose.msra.mxu0 0
        %367 = vmatprep.subr.bf16.mxu0 0
        %368 = vmatpush1.bf16.xpose.msra.mxu0 0
        %369 = vmatprep.subr.bf16.mxu0 0
        %370 = vmatpush1.bf16.xpose.msra.mxu0 0
        %371 = vmatprep.subr.bf16.mxu0 0
        %372 = vmatpush1.bf16.xpose.msra.mxu0 %v355
        %373 = vmatprep.subr.bf16.mxu0 0
        %374 = vmatpush2.bf16.xpose.msra.mxu0 0
        %375 = vmatprep.subr.bf16.mxu0 0
        %376 = vmatpush2.bf16.xpose.msra.mxu0 0
        %377 = vmatprep.subr.bf16.mxu0 0
        %378 = vmatpush2.bf16.xpose.msra.mxu0 0
        %379 = vmatprep.subr.bf16.mxu0 0
        %380 = vmatpush2.bf16.xpose.msra.mxu0 0
        %381 = vmatprep.subr.bf16.mxu0 0
        %382 = vmatpush2.bf16.xpose.msra.mxu0 0
        %383 = vmatprep.subr.bf16.mxu0 0
        %384 = vmatpush2.bf16.xpose.msra.mxu0 0
        %385 = vmatprep.subr.bf16.mxu0 0
        %386 = vmatpush2.bf16.xpose.msra.mxu0 0
        %387 = vmatprep.subr.bf16.mxu0 0
        %388 = vmatpush2.bf16.xpose.msra.mxu0 0
        %389 = vmatprep.mubr.bf16.mxu0 0
        %390 = vmatmul.mubr.bf16.gmra.mxu0 %v352
        %v391 = vpop.f32.mrf.mxu0
        %v392 = vadd.f32 0.0, %v391
        %v393 = vpop.f32.mrf.mxu0
        %v394 = vpop.f32.mrf.mxu0
        %v395 = vpop.f32.mrf.mxu0
        %396 = vdwg.mxu0
        %v397 = vsel %vm350, %v392, -inf
        %398 = vmax.xlane.f32.xlu0 %v397
        %v399 = vpop.xlane.xlu0 %398
        %v400 = vsub.f32 %v392, %v399
        %v401 = vmul.f32 %v400, 1.442695
        %v402 = vpow.pop %v401
        %v403 = vsel %vm350, %v402, 0.0
        %404 = vadd.xlane.f32.xlu0 %v403
        %v405 = vpop.xlane.xlu0 %404
        %v406 = vpack.c.bf16 %v402, %v402
        %407 = vrot.lane.b32.xlu0 %v338, 64
        %v408 = vpop.permute.xlu0 %407
        %v410 = vsel %vm350, %v406, 0
        %vm412 = vcmask 1043456
        %v414 = vsel %vm412, %v408, 0
        %416 = vmatprep.subr.bf16.mxu0 0
        %417 = vmatpush1.bf16.msra.mxu0 0
        %418 = vmatprep.subr.bf16.mxu0 0
        %419 = vmatpush1.bf16.msra.mxu0 0
        %420 = vmatprep.subr.bf16.mxu0 0
        %421 = vmatpush1.bf16.msra.mxu0 0
        %422 = vmatprep.subr.bf16.mxu0 0
        %423 = vmatpush1.bf16.msra.mxu0 0
        %424 = vmatprep.subr.bf16.mxu0 0
        %425 = vmatpush1.bf16.msra.mxu0 0
        %426 = vmatprep.subr.bf16.mxu0 0
        %427 = vmatpush1.bf16.msra.mxu0 0
        %428 = vmatprep.subr.bf16.mxu0 0
        %429 = vmatpush1.bf16.msra.mxu0 0
        %430 = vmatprep.subr.bf16.mxu0 0
        %431 = vmatpush1.bf16.msra.mxu0 %v414
        %432 = vmatprep.subr.bf16.mxu0 0
        %433 = vmatpush2.bf16.msra.mxu0 0
        %434 = vmatprep.subr.bf16.mxu0 0
        %435 = vmatpush2.bf16.msra.mxu0 0
        %436 = vmatprep.subr.bf16.mxu0 0
        %437 = vmatpush2.bf16.msra.mxu0 0
        %438 = vmatprep.subr.bf16.mxu0 0
        %439 = vmatpush2.bf16.msra.mxu0 0
        %440 = vmatprep.subr.bf16.mxu0 0
        %441 = vmatpush2.bf16.msra.mxu0 0
        %442 = vmatprep.subr.bf16.mxu0 0
        %443 = vmatpush2.bf16.msra.mxu0 0
        %444 = vmatprep.subr.bf16.mxu0 0
        %445 = vmatpush2.bf16.msra.mxu0 0
        %446 = vmatprep.subr.bf16.mxu0 0
        %447 = vmatpush2.bf16.msra.mxu0 0
        %448 = vmatprep.mubr.bf16.mxu0 0
        %449 = vmatmul.mubr.bf16.gmra.mxu0 %v410
        %v450 = vpop.f32.mrf.mxu0
        %v451 = vadd.f32 0.0, %v450
        %v452 = vpop.f32.mrf.mxu0
        %v453 = vpop.f32.mrf.mxu0
        %v454 = vpop.f32.mrf.mxu0
        %455 = vdwg.mxu0
        %v456 = vrcp.pop %v405
        %v457 = vmul.f32 %v451, %v456
        %v458 = vpack.c.bf16 %v457, %v457
        %v459 = vld [vmem:[#allocation2] sm:$0xff]
        %v460 = vld [vmem:[#allocation8] sm:$0xf]
        %v462 = vsel %vm350, %v458, 0
        %v465 = vsel %vm412, %v460, 0
        %467 = vmatprep.subr.bf16.mxu0 0
        %468 = vmatpush1.bf16.msra.mxu0 0
        %469 = vmatprep.subr.bf16.mxu0 0
        %470 = vmatpush1.bf16.msra.mxu0 0
        %471 = vmatprep.subr.bf16.mxu0 0
        %472 = vmatpush1.bf16.msra.mxu0 0
        %473 = vmatprep.subr.bf16.mxu0 0
        %474 = vmatpush1.bf16.msra.mxu0 0
        %475 = vmatprep.subr.bf16.mxu0 0
        %476 = vmatpush1.bf16.msra.mxu0 0
        %477 = vmatprep.subr.bf16.mxu0 0
        %478 = vmatpush1.bf16.msra.mxu0 0
        %479 = vmatprep.subr.bf16.mxu0 0
        %480 = vmatpush1.bf16.msra.mxu0 0
        %481 = vmatprep.subr.bf16.mxu0 0
        %482 = vmatpush1.bf16.msra.mxu0 %v465
        %483 = vmatprep.subr.bf16.mxu0 0
        %484 = vmatpush2.bf16.msra.mxu0 0
        %485 = vmatprep.subr.bf16.mxu0 0
        %486 = vmatpush2.bf16.msra.mxu0 0
        %487 = vmatprep.subr.bf16.mxu0 0
        %488 = vmatpush2.bf16.msra.mxu0 0
        %489 = vmatprep.subr.bf16.mxu0 0
        %490 = vmatpush2.bf16.msra.mxu0 0
        %491 = vmatprep.subr.bf16.mxu0 0
        %492 = vmatpush2.bf16.msra.mxu0 0
        %493 = vmatprep.subr.bf16.mxu0 0
        %494 = vmatpush2.bf16.msra.mxu0 0
        %495 = vmatprep.subr.bf16.mxu0 0
        %496 = vmatpush2.bf16.msra.mxu0 0
        %497 = vmatprep.subr.bf16.mxu0 0
        %498 = vmatpush2.bf16.msra.mxu0 0
        %499 = vmatprep.mubr.bf16.mxu0 0
        %500 = vmatmul.mubr.bf16.gmra.mxu0 %v462
        %v501 = vpop.f32.mrf.mxu0
        %v502 = vadd.f32 0.0, %v501
        %v503 = vpop.f32.mrf.mxu0
        %v504 = vpop.f32.mrf.mxu0
        %v505 = vpop.f32.mrf.mxu0
        %506 = vdwg.mxu0
        %v507 = vadd.f32 %v459, %v502
        %508 = vst.msk [vmem:[#allocation2] sm:$0xff] %vm294, %v507
        %509 = vrot.lane.b32.xlu0 %v338, 120
        %v510 = vpop.permute.xlu0 %509
        %511 = vrot.lane.b32.xlu0 %v338, 88
        %v512 = vpop.permute.xlu0 %511
        %v514 = vsel %vm350, %v510, 0
        %v517 = vsel %vm350, %v512, 0
        %519 = vmatprep.subr.bf16.mxu0 0
        %520 = vmatpush1.bf16.xpose.msra.mxu0 0
        %521 = vmatprep.subr.bf16.mxu0 0
        %522 = vmatpush1.bf16.xpose.msra.mxu0 0
        %523 = vmatprep.subr.bf16.mxu0 0
        %524 = vmatpush1.bf16.xpose.msra.mxu0 0
        %525 = vmatprep.subr.bf16.mxu0 0
        %526 = vmatpush1.bf16.xpose.msra.mxu0 0
        %527 = vmatprep.subr.bf16.mxu0 0
        %528 = vmatpush1.bf16.xpose.msra.mxu0 0
        %529 = vmatprep.subr.bf16.mxu0 0
        %530 = vmatpush1.bf16.xpose.msra.mxu0 0
        %531 = vmatprep.subr.bf16.mxu0 0
        %532 = vmatpush1.bf16.xpose.msra.mxu0 0
        %533 = vmatprep.subr.bf16.mxu0 0
        %534 = vmatpush1.bf16.xpose.msra.mxu0 %v517
        %535 = vmatprep.subr.bf16.mxu0 0
        %536 = vmatpush2.bf16.xpose.msra.mxu0 0
        %537 = vmatprep.subr.bf16.mxu0 0
        %538 = vmatpush2.bf16.xpose.msra.mxu0 0
        %539 = vmatprep.subr.bf16.mxu0 0
        %540 = vmatpush2.bf16.xpose.msra.mxu0 0
        %541 = vmatprep.subr.bf16.mxu0 0
        %542 = vmatpush2.bf16.xpose.msra.mxu0 0
        %543 = vmatprep.subr.bf16.mxu0 0
        %544 = vmatpush2.bf16.xpose.msra.mxu0 0
        %545 = vmatprep.subr.bf16.mxu0 0
        %546 = vmatpush2.bf16.xpose.msra.mxu0 0
        %547 = vmatprep.subr.bf16.mxu0 0
        %548 = vmatpush2.bf16.xpose.msra.mxu0 0
        %549 = vmatprep.subr.bf16.mxu0 0
        %550 = vmatpush2.bf16.xpose.msra.mxu0 0
        %551 = vmatprep.mubr.bf16.mxu0 0
        %552 = vmatmul.mubr.bf16.gmra.mxu0 %v514
        %v553 = vpop.f32.mrf.mxu0
        %v554 = vadd.f32 0.0, %v553
        %v555 = vpop.f32.mrf.mxu0
        %v556 = vpop.f32.mrf.mxu0
        %v557 = vpop.f32.mrf.mxu0
        %558 = vdwg.mxu0
        %v559 = vsel %vm350, %v554, -inf
        %560 = vmax.xlane.f32.xlu0 %v559
        %v561 = vpop.xlane.xlu0 %560
        %v562 = vsub.f32 %v554, %v561
        %v563 = vmul.f32 %v562, 1.442695
        %v564 = vpow.pop %v563
        %v565 = vsel %vm350, %v564, 0.0
        %566 = vadd.xlane.f32.xlu0 %v565
        %v567 = vpop.xlane.xlu0 %566
        %v568 = vpack.c.bf16 %v564, %v564
        %569 = vrot.lane.b32.xlu0 %v338, 56
        %v570 = vpop.permute.xlu0 %569
        %v572 = vsel %vm350, %v568, 0
        %v575 = vsel %vm412, %v570, 0
        %577 = vmatprep.subr.bf16.mxu0 0
        %578 = vmatpush1.bf16.msra.mxu0 0
        %579 = vmatprep.subr.bf16.mxu0 0
        %580 = vmatpush1.bf16.msra.mxu0 0
        %581 = vmatprep.subr.bf16.mxu0 0
        %582 = vmatpush1.bf16.msra.mxu0 0
        %583 = vmatprep.subr.bf16.mxu0 0
        %584 = vmatpush1.bf16.msra.mxu0 0
        %585 = vmatprep.subr.bf16.mxu0 0
        %586 = vmatpush1.bf16.msra.mxu0 0
        %587 = vmatprep.subr.bf16.mxu0 0
        %588 = vmatpush1.bf16.msra.mxu0 0
        %589 = vmatprep.subr.bf16.mxu0 0
        %590 = vmatpush1.bf16.msra.mxu0 0
        %591 = vmatprep.subr.bf16.mxu0 0
        %592 = vmatpush1.bf16.msra.mxu0 %v575
        %593 = vmatprep.subr.bf16.mxu0 0
        %594 = vmatpush2.bf16.msra.mxu0 0
        %595 = vmatprep.subr.bf16.mxu0 0
        %596 = vmatpush2.bf16.msra.mxu0 0
        %597 = vmatprep.subr.bf16.mxu0 0
        %598 = vmatpush2.bf16.msra.mxu0 0
        %599 = vmatprep.subr.bf16.mxu0 0
        %600 = vmatpush2.bf16.msra.mxu0 0
        %601 = vmatprep.subr.bf16.mxu0 0
        %602 = vmatpush2.bf16.msra.mxu0 0
        %603 = vmatprep.subr.bf16.mxu0 0
        %604 = vmatpush2.bf16.msra.mxu0 0
        %605 = vmatprep.subr.bf16.mxu0 0
        %606 = vmatpush2.bf16.msra.mxu0 0
        %607 = vmatprep.subr.bf16.mxu0 0
        %608 = vmatpush2.bf16.msra.mxu0 0
        %609 = vmatprep.mubr.bf16.mxu0 0
        %610 = vmatmul.mubr.bf16.gmra.mxu0 %v572
        %v611 = vpop.f32.mrf.mxu0
        %v612 = vadd.f32 0.0, %v611
        %v613 = vpop.f32.mrf.mxu0
        %v614 = vpop.f32.mrf.mxu0
        %v615 = vpop.f32.mrf.mxu0
        %616 = vdwg.mxu0
        %v617 = vrcp.pop %v567
        %v618 = vmul.f32 %v612, %v617
        %v619 = vpack.c.bf16 %v618, %v618
        %v620 = vld [vmem:[#allocation2] sm:$0xff]
        %v621 = vld [vmem:[#allocation8 + $0x4] sm:$0xf]
        %v623 = vsel %vm350, %v619, 0
        %v626 = vsel %vm412, %v621, 0
        %628 = vmatprep.subr.bf16.mxu0 0
        %629 = vmatpush1.bf16.msra.mxu0 0
        %630 = vmatprep.subr.bf16.mxu0 0
        %631 = vmatpush1.bf16.msra.mxu0 0
        %632 = vmatprep.subr.bf16.mxu0 0
        %633 = vmatpush1.bf16.msra.mxu0 0
        %634 = vmatprep.subr.bf16.mxu0 0
        %635 = vmatpush1.bf16.msra.mxu0 0
        %636 = vmatprep.subr.bf16.mxu0 0
        %637 = vmatpush1.bf16.msra.mxu0 0
        %638 = vmatprep.subr.bf16.mxu0 0
        %639 = vmatpush1.bf16.msra.mxu0 0
        %640 = vmatprep.subr.bf16.mxu0 0
        %641 = vmatpush1.bf16.msra.mxu0 0
        %642 = vmatprep.subr.bf16.mxu0 0
        %643 = vmatpush1.bf16.msra.mxu0 %v626
        %644 = vmatprep.subr.bf16.mxu0 0
        %645 = vmatpush2.bf16.msra.mxu0 0
        %646 = vmatprep.subr.bf16.mxu0 0
        %647 = vmatpush2.bf16.msra.mxu0 0
        %648 = vmatprep.subr.bf16.mxu0 0
        %649 = vmatpush2.bf16.msra.mxu0 0
        %650 = vmatprep.subr.bf16.mxu0 0
        %651 = vmatpush2.bf16.msra.mxu0 0
        %652 = vmatprep.subr.bf16.mxu0 0
        %653 = vmatpush2.bf16.msra.mxu0 0
        %654 = vmatprep.subr.bf16.mxu0 0
        %655 = vmatpush2.bf16.msra.mxu0 0
        %656 = vmatprep.subr.bf16.mxu0 0
        %657 = vmatpush2.bf16.msra.mxu0 0
        %658 = vmatprep.subr.bf16.mxu0 0
        %659 = vmatpush2.bf16.msra.mxu0 0
        %660 = vmatprep.mubr.bf16.mxu0 0
        %661 = vmatmul.mubr.bf16.gmra.mxu0 %v623
        %v662 = vpop.f32.mrf.mxu0
        %v663 = vadd.f32 0.0, %v662
        %v664 = vpop.f32.mrf.mxu0
        %v665 = vpop.f32.mrf.mxu0
        %v666 = vpop.f32.mrf.mxu0
        %667 = vdwg.mxu0
        %v668 = vadd.f32 %v620, %v663
        %669 = vst.msk [vmem:[#allocation2] sm:$0xff] %vm294, %v668
        %670 = vrot.lane.b32.xlu0 %v338, 112
        %v671 = vpop.permute.xlu0 %670
        %672 = vrot.lane.b32.xlu0 %v338, 80
        %v673 = vpop.permute.xlu0 %672
        %v675 = vsel %vm350, %v671, 0
        %v678 = vsel %vm350, %v673, 0
        %680 = vmatprep.subr.bf16.mxu0 0
        %681 = vmatpush1.bf16.xpose.msra.mxu0 0
        %682 = vmatprep.subr.bf16.mxu0 0
        %683 = vmatpush1.bf16.xpose.msra.mxu0 0
        %684 = vmatprep.subr.bf16.mxu0 0
        %685 = vmatpush1.bf16.xpose.msra.mxu0 0
        %686 = vmatprep.subr.bf16.mxu0 0
        %687 = vmatpush1.bf16.xpose.msra.mxu0 0
        %688 = vmatprep.subr.bf16.mxu0 0
        %689 = vmatpush1.bf16.xpose.msra.mxu0 0
        %690 = vmatprep.subr.bf16.mxu0 0
        %691 = vmatpush1.bf16.xpose.msra.mxu0 0
        %692 = vmatprep.subr.bf16.mxu0 0
        %693 = vmatpush1.bf16.xpose.msra.mxu0 0
        %694 = vmatprep.subr.bf16.mxu0 0
        %695 = vmatpush1.bf16.xpose.msra.mxu0 %v678
        %696 = vmatprep.subr.bf16.mxu0 0
        %697 = vmatpush2.bf16.xpose.msra.mxu0 0
        %698 = vmatprep.subr.bf16.mxu0 0
        %699 = vmatpush2.bf16.xpose.msra.mxu0 0
        %700 = vmatprep.subr.bf16.mxu0 0
        %701 = vmatpush2.bf16.xpose.msra.mxu0 0
        %702 = vmatprep.subr.bf16.mxu0 0
        %703 = vmatpush2.bf16.xpose.msra.mxu0 0
        %704 = vmatprep.subr.bf16.mxu0 0
        %705 = vmatpush2.bf16.xpose.msra.mxu0 0
        %706 = vmatprep.subr.bf16.mxu0 0
        %707 = vmatpush2.bf16.xpose.msra.mxu0 0
        %708 = vmatprep.subr.bf16.mxu0 0
        %709 = vmatpush2.bf16.xpose.msra.mxu0 0
        %710 = vmatprep.subr.bf16.mxu0 0
        %711 = vmatpush2.bf16.xpose.msra.mxu0 0
        %712 = vmatprep.mubr.bf16.mxu0 0
        %713 = vmatmul.mubr.bf16.gmra.mxu0 %v675
        %v714 = vpop.f32.mrf.mxu0
        %v715 = vadd.f32 0.0, %v714
        %v716 = vpop.f32.mrf.mxu0
        %v717 = vpop.f32.mrf.mxu0
        %v718 = vpop.f32.mrf.mxu0
        %719 = vdwg.mxu0
        %v720 = vsel %vm350, %v715, -inf
        %721 = vmax.xlane.f32.xlu0 %v720
        %v722 = vpop.xlane.xlu0 %721
        %v723 = vsub.f32 %v715, %v722
        %v724 = vmul.f32 %v723, 1.442695
        %v725 = vpow.pop %v724
        %v726 = vsel %vm350, %v725, 0.0
        %727 = vadd.xlane.f32.xlu0 %v726
        %v728 = vpop.xlane.xlu0 %727
        %v729 = vpack.c.bf16 %v725, %v725
        %730 = vrot.lane.b32.xlu0 %v338, 48
        %v731 = vpop.permute.xlu0 %730
        %v733 = vsel %vm350, %v729, 0
        %v736 = vsel %vm412, %v731, 0
        %738 = vmatprep.subr.bf16.mxu0 0
        %739 = vmatpush1.bf16.msra.mxu0 0
        %740 = vmatprep.subr.bf16.mxu0 0
        %741 = vmatpush1.bf16.msra.mxu0 0
        %742 = vmatprep.subr.bf16.mxu0 0
        %743 = vmatpush1.bf16.msra.mxu0 0
        %744 = vmatprep.subr.bf16.mxu0 0
        %745 = vmatpush1.bf16.msra.mxu0 0
        %746 = vmatprep.subr.bf16.mxu0 0
        %747 = vmatpush1.bf16.msra.mxu0 0
        %748 = vmatprep.subr.bf16.mxu0 0
        %749 = vmatpush1.bf16.msra.mxu0 0
        %750 = vmatprep.subr.bf16.mxu0 0
        %751 = vmatpush1.bf16.msra.mxu0 0
        %752 = vmatprep.subr.bf16.mxu0 0
        %753 = vmatpush1.bf16.msra.mxu0 %v736
        %754 = vmatprep.subr.bf16.mxu0 0
        %755 = vmatpush2.bf16.msra.mxu0 0
        %756 = vmatprep.subr.bf16.mxu0 0
        %757 = vmatpush2.bf16.msra.mxu0 0
        %758 = vmatprep.subr.bf16.mxu0 0
        %759 = vmatpush2.bf16.msra.mxu0 0
        %760 = vmatprep.subr.bf16.mxu0 0
        %761 = vmatpush2.bf16.msra.mxu0 0
        %762 = vmatprep.subr.bf16.mxu0 0
        %763 = vmatpush2.bf16.msra.mxu0 0
        %764 = vmatprep.subr.bf16.mxu0 0
        %765 = vmatpush2.bf16.msra.mxu0 0
        %766 = vmatprep.subr.bf16.mxu0 0
        %767 = vmatpush2.bf16.msra.mxu0 0
        %768 = vmatprep.subr.bf16.mxu0 0
        %769 = vmatpush2.bf16.msra.mxu0 0
        %770 = vmatprep.mubr.bf16.mxu0 0
        %771 = vmatmul.mubr.bf16.gmra.mxu0 %v733
        %v772 = vpop.f32.mrf.mxu0
        %v773 = vadd.f32 0.0, %v772
        %v774 = vpop.f32.mrf.mxu0
        %v775 = vpop.f32.mrf.mxu0
        %v776 = vpop.f32.mrf.mxu0
        %777 = vdwg.mxu0
        %v778 = vrcp.pop %v728
        %v779 = vmul.f32 %v773, %v778
        %v780 = vpack.c.bf16 %v779, %v779
        %v781 = vld [vmem:[#allocation2] sm:$0xff]
        %v782 = vld [vmem:[#allocation8 + $0x8] sm:$0xf]
        %v784 = vsel %vm350, %v780, 0
        %v787 = vsel %vm412, %v782, 0
        %789 = vmatprep.subr.bf16.mxu0 0
        %790 = vmatpush1.bf16.msra.mxu0 0
        %791 = vmatprep.subr.bf16.mxu0 0
        %792 = vmatpush1.bf16.msra.mxu0 0
        %793 = vmatprep.subr.bf16.mxu0 0
        %794 = vmatpush1.bf16.msra.mxu0 0
        %795 = vmatprep.subr.bf16.mxu0 0
        %796 = vmatpush1.bf16.msra.mxu0 0
        %797 = vmatprep.subr.bf16.mxu0 0
        %798 = vmatpush1.bf16.msra.mxu0 0
        %799 = vmatprep.subr.bf16.mxu0 0
        %800 = vmatpush1.bf16.msra.mxu0 0
        %801 = vmatprep.subr.bf16.mxu0 0
        %802 = vmatpush1.bf16.msra.mxu0 0
        %803 = vmatprep.subr.bf16.mxu0 0
        %804 = vmatpush1.bf16.msra.mxu0 %v787
        %805 = vmatprep.subr.bf16.mxu0 0
        %806 = vmatpush2.bf16.msra.mxu0 0
        %807 = vmatprep.subr.bf16.mxu0 0
        %808 = vmatpush2.bf16.msra.mxu0 0
        %809 = vmatprep.subr.bf16.mxu0 0
        %810 = vmatpush2.bf16.msra.mxu0 0
        %811 = vmatprep.subr.bf16.mxu0 0
        %812 = vmatpush2.bf16.msra.mxu0 0
        %813 = vmatprep.subr.bf16.mxu0 0
        %814 = vmatpush2.bf16.msra.mxu0 0
        %815 = vmatprep.subr.bf16.mxu0 0
        %816 = vmatpush2.bf16.msra.mxu0 0
        %817 = vmatprep.subr.bf16.mxu0 0
        %818 = vmatpush2.bf16.msra.mxu0 0
        %819 = vmatprep.subr.bf16.mxu0 0
        %820 = vmatpush2.bf16.msra.mxu0 0
        %821 = vmatprep.mubr.bf16.mxu0 0
        %822 = vmatmul.mubr.bf16.gmra.mxu0 %v784
        %v823 = vpop.f32.mrf.mxu0
        %v824 = vadd.f32 0.0, %v823
        %v825 = vpop.f32.mrf.mxu0
        %v826 = vpop.f32.mrf.mxu0
        %v827 = vpop.f32.mrf.mxu0
        %828 = vdwg.mxu0
        %v829 = vadd.f32 %v781, %v824
        %830 = vst.msk [vmem:[#allocation2] sm:$0xff] %vm294, %v829
        %831 = vrot.lane.b32.xlu0 %v338, 104
        %v832 = vpop.permute.xlu0 %831
        %833 = vrot.lane.b32.xlu0 %v338, 72
        %v834 = vpop.permute.xlu0 %833
        %v836 = vsel %vm350, %v832, 0
        %v839 = vsel %vm350, %v834, 0
        %841 = vmatprep.subr.bf16.mxu0 0
        %842 = vmatpush1.bf16.xpose.msra.mxu0 0
        %843 = vmatprep.subr.bf16.mxu0 0
        %844 = vmatpush1.bf16.xpose.msra.mxu0 0
        %845 = vmatprep.subr.bf16.mxu0 0
        %846 = vmatpush1.bf16.xpose.msra.mxu0 0
        %847 = vmatprep.subr.bf16.mxu0 0
        %848 = vmatpush1.bf16.xpose.msra.mxu0 0
        %849 = vmatprep.subr.bf16.mxu0 0
        %850 = vmatpush1.bf16.xpose.msra.mxu0 0
        %851 = vmatprep.subr.bf16.mxu0 0
        %852 = vmatpush1.bf16.xpose.msra.mxu0 0
        %853 = vmatprep.subr.bf16.mxu0 0
        %854 = vmatpush1.bf16.xpose.msra.mxu0 0
        %855 = vmatprep.subr.bf16.mxu0 0
        %856 = vmatpush1.bf16.xpose.msra.mxu0 %v839
        %857 = vmatprep.subr.bf16.mxu0 0
        %858 = vmatpush2.bf16.xpose.msra.mxu0 0
        %859 = vmatprep.subr.bf16.mxu0 0
        %860 = vmatpush2.bf16.xpose.msra.mxu0 0
        %861 = vmatprep.subr.bf16.mxu0 0
        %862 = vmatpush2.bf16.xpose.msra.mxu0 0
        %863 = vmatprep.subr.bf16.mxu0 0
        %864 = vmatpush2.bf16.xpose.msra.mxu0 0
        %865 = vmatprep.subr.bf16.mxu0 0
        %866 = vmatpush2.bf16.xpose.msra.mxu0 0
        %867 = vmatprep.subr.bf16.mxu0 0
        %868 = vmatpush2.bf16.xpose.msra.mxu0 0
        %869 = vmatprep.subr.bf16.mxu0 0
        %870 = vmatpush2.bf16.xpose.msra.mxu0 0
        %871 = vmatprep.subr.bf16.mxu0 0
        %872 = vmatpush2.bf16.xpose.msra.mxu0 0
        %873 = vmatprep.mubr.bf16.mxu0 0
        %874 = vmatmul.mubr.bf16.gmra.mxu0 %v836
        %v875 = vpop.f32.mrf.mxu0
        %v876 = vadd.f32 0.0, %v875
        %v877 = vpop.f32.mrf.mxu0
        %v878 = vpop.f32.mrf.mxu0
        %v879 = vpop.f32.mrf.mxu0
        %880 = vdwg.mxu0
        %v881 = vsel %vm350, %v876, -inf
        %882 = vmax.xlane.f32.xlu0 %v881
        %v883 = vpop.xlane.xlu0 %882
        %v884 = vsub.f32 %v876, %v883
        %v885 = vmul.f32 %v884, 1.442695
        %v886 = vpow.pop %v885
        %v887 = vsel %vm350, %v886, 0.0
        %888 = vadd.xlane.f32.xlu0 %v887
        %v889 = vpop.xlane.xlu0 %888
        %v890 = vpack.c.bf16 %v886, %v886
        %891 = vrot.lane.b32.xlu0 %v338, 40
        %v892 = vpop.permute.xlu0 %891
        %v894 = vsel %vm350, %v890, 0
        %v897 = vsel %vm412, %v892, 0
        %899 = vmatprep.subr.bf16.mxu0 0
        %900 = vmatpush1.bf16.msra.mxu0 0
        %901 = vmatprep.subr.bf16.mxu0 0
        %902 = vmatpush1.bf16.msra.mxu0 0
        %903 = vmatprep.subr.bf16.mxu0 0
        %904 = vmatpush1.bf16.msra.mxu0 0
        %905 = vmatprep.subr.bf16.mxu0 0
        %906 = vmatpush1.bf16.msra.mxu0 0
        %907 = vmatprep.subr.bf16.mxu0 0
        %908 = vmatpush1.bf16.msra.mxu0 0
        %909 = vmatprep.subr.bf16.mxu0 0
        %910 = vmatpush1.bf16.msra.mxu0 0
        %911 = vmatprep.subr.bf16.mxu0 0
        %912 = vmatpush1.bf16.msra.mxu0 0
        %913 = vmatprep.subr.bf16.mxu0 0
        %914 = vmatpush1.bf16.msra.mxu0 %v897
        %915 = vmatprep.subr.bf16.mxu0 0
        %916 = vmatpush2.bf16.msra.mxu0 0
        %917 = vmatprep.subr.bf16.mxu0 0
        %918 = vmatpush2.bf16.msra.mxu0 0
        %919 = vmatprep.subr.bf16.mxu0 0
        %920 = vmatpush2.bf16.msra.mxu0 0
        %921 = vmatprep.subr.bf16.mxu0 0
        %922 = vmatpush2.bf16.msra.mxu0 0
        %923 = vmatprep.subr.bf16.mxu0 0
        %924 = vmatpush2.bf16.msra.mxu0 0
        %925 = vmatprep.subr.bf16.mxu0 0
        %926 = vmatpush2.bf16.msra.mxu0 0
        %927 = vmatprep.subr.bf16.mxu0 0
        %928 = vmatpush2.bf16.msra.mxu0 0
        %929 = vmatprep.subr.bf16.mxu0 0
        %930 = vmatpush2.bf16.msra.mxu0 0
        %931 = vmatprep.mubr.bf16.mxu0 0
        %932 = vmatmul.mubr.bf16.gmra.mxu0 %v894
        %v933 = vpop.f32.mrf.mxu0
        %v934 = vadd.f32 0.0, %v933
        %v935 = vpop.f32.mrf.mxu0
        %v936 = vpop.f32.mrf.mxu0
        %v937 = vpop.f32.mrf.mxu0
        %938 = vdwg.mxu0
        %v939 = vrcp.pop %v889
        %v940 = vmul.f32 %v934, %v939
        %v941 = vpack.c.bf16 %v940, %v940
        %v942 = vld [vmem:[#allocation2] sm:$0xff]
        %v943 = vld [vmem:[#allocation8 + $0xc] sm:$0xf]
        %v945 = vsel %vm350, %v941, 0
        %v948 = vsel %vm412, %v943, 0
        %950 = vmatprep.subr.bf16.mxu0 0
        %951 = vmatpush1.bf16.msra.mxu0 0
        %952 = vmatprep.subr.bf16.mxu0 0
        %953 = vmatpush1.bf16.msra.mxu0 0
        %954 = vmatprep.subr.bf16.mxu0 0
        %955 = vmatpush1.bf16.msra.mxu0 0
        %956 = vmatprep.subr.bf16.mxu0 0
        %957 = vmatpush1.bf16.msra.mxu0 0
        %958 = vmatprep.subr.bf16.mxu0 0
        %959 = vmatpush1.bf16.msra.mxu0 0
        %960 = vmatprep.subr.bf16.mxu0 0
        %961 = vmatpush1.bf16.msra.mxu0 0
        %962 = vmatprep.subr.bf16.mxu0 0
        %963 = vmatpush1.bf16.msra.mxu0 0
        %964 = vmatprep.subr.bf16.mxu0 0
        %965 = vmatpush1.bf16.msra.mxu0 %v948
        %966 = vmatprep.subr.bf16.mxu0 0
        %967 = vmatpush2.bf16.msra.mxu0 0
        %968 = vmatprep.subr.bf16.mxu0 0
        %969 = vmatpush2.bf16.msra.mxu0 0
        %970 = vmatprep.subr.bf16.mxu0 0
        %971 = vmatpush2.bf16.msra.mxu0 0
        %972 = vmatprep.subr.bf16.mxu0 0
        %973 = vmatpush2.bf16.msra.mxu0 0
        %974 = vmatprep.subr.bf16.mxu0 0
        %975 = vmatpush2.bf16.msra.mxu0 0
        %976 = vmatprep.subr.bf16.mxu0 0
        %977 = vmatpush2.bf16.msra.mxu0 0
        %978 = vmatprep.subr.bf16.mxu0 0
        %979 = vmatpush2.bf16.msra.mxu0 0
        %980 = vmatprep.subr.bf16.mxu0 0
        %981 = vmatpush2.bf16.msra.mxu0 0
        %982 = vmatprep.mubr.bf16.mxu0 0
        %983 = vmatmul.mubr.bf16.gmra.mxu0 %v945
        %v984 = vpop.f32.mrf.mxu0
        %v985 = vadd.f32 0.0, %v984
        %v986 = vpop.f32.mrf.mxu0
        %v987 = vpop.f32.mrf.mxu0
        %v988 = vpop.f32.mrf.mxu0
        %989 = vdwg.mxu0
        %v990 = vadd.f32 %v942, %v985
        %991 = vst.msk [vmem:[#allocation2] sm:$0xff] %vm294, %v990
        %v992 = vld [vmem:[#allocation2] sm:$0xff]
        %993 = vst.msk [vmem:[%s268] sm:$0xff] %vm294, %v992
        %s994 = sand.u32 %s141, 1
        %s995 = scalar_lea.sflag [#allocation5], %s994
        %s996 = sand.u32 %s141, 1
        %s997 = smul.addr %s996, 8
        %s998 = scalar_lea.vmem [#allocation9], %s997
        // Predicated region
        $region53: #{tpu_custom_call.1} parent=39 // pred_check
          %p999 = pneg %p151
        $region54: #{tpu_custom_call.1} parent=39 // pred_check_branch
          %1001 = sbr.rel (%p999) target = $region56
        $region55: #{tpu_custom_call.1} parent=39 // pred_region
          %s1003 = ssub.s32 128, 128
          %1004 = vsyncadd %s995, %s1003
          %s1005 = smul.addr %s23, 128
          %s1006 = scalar_lea.hbm %s5, %s1005
          %s1008 = sshll.u32 %s998, 4
          %s1009 = int_to_ptr.vmem [resolvable:$true] %s1008
          %1011 = dma.vmem_to_hbm [thread:$0]  %s1009, 128, %s1006, %s995
        $region56: #{tpu_custom_call.1} parent=39 // pred_fallthru
          _
      $region40: #{tpu_custom_call.1} parent=5 // pred_fallthru
        _
      %p1012 = scmp.le.s32.totalorder 2, %s18
      // Predicated region
      $region57: #{tpu_custom_call.1} parent=5 // pred_check
        %p1013 = pneg %p1012
      $region58: #{tpu_custom_call.1} parent=5 // pred_check_branch
        %1015 = sbr.rel (%p1013) target = $region60
      $region59: #{tpu_custom_call.1} parent=5 // pred_region
        %s1016 = ssub.s32 %s18, 2
        // Predicated region
        $region61: #{tpu_custom_call.1} parent=59 // pred_check
          %p1017 = pneg %p157
        $region62: #{tpu_custom_call.1} parent=59 // pred_check_branch
          %1019 = sbr.rel (%p1017) target = $region64
        $region63: #{tpu_custom_call.1} parent=59 // pred_region
          %s1020 = sand.u32 %s142, 1
          %s1021 = scalar_lea.sflag [#allocation5], %s1020
          %s1022 = sand.u32 %s142, 1
          %s1023 = smul.addr %s1022, 8
          %s1024 = scalar_lea.vmem [#allocation9], %s1023
          %1025 = dma.done %s1021, 128
        $region64: #{tpu_custom_call.1} parent=59 // pred_fallthru
          _
      $region60: #{tpu_custom_call.1} parent=5 // pred_fallthru
        _
    $region6: #{tpu_custom_call.1} parent=1 // loop_footer
      %s22 = sadd.s32 1, %s18
    $region7: #{tpu_custom_call.1} parent=1 // loop_footer_branch
      %17 = sbr.rel target = $region3
    $region8: #{tpu_custom_call.1} parent=1 // loop_exit
      _
    %1026 = vsyncpa [#allocation4], 1
    %s1027 = scalar_lea.sflag [#allocation4], 1
    %1028 = vsyncpa %s1027, 1
    %1029 = vsyncpa [#allocation7], 1
    %1030 = vsyncpa [#allocation5], 1
    %s1031 = scalar_lea.sflag [#allocation5], 1
    %1032 = vsyncpa %s1031, 1

</llo_original>
